<compile_context>
chip_gen: v7x
topology: tpu7x:2x2x1
jax: 0.10.0
libtpu: 0.0.40
codegen_flags: <defaults>
</compile_context>

<pallas_src>
import math

import jax
import jax.numpy as jnp
from jax import lax
from jax.experimental import pallas as pl
from jax.experimental.pallas import tpu as pltpu

_NEG_BIG = -1e30  # "minus infinity" stand-in that keeps all arithmetic finite


def _make_kernel(n, c, tn, tc, n_class_blocks):
    def kernel(x_ref, t_ref, out_ref, m_sc, l_sc, st_sc, stx_sc):
        i = pl.program_id(0)  # batch-block index ("parallel")
        j = pl.program_id(1)  # class-block index ("arbitrary", reduction, innermost)

        @pl.when(j == 0)
        def _():
            m_sc[...] = jnp.full_like(m_sc, _NEG_BIG)
            l_sc[...] = jnp.zeros_like(l_sc)
            st_sc[...] = jnp.zeros_like(st_sc)
            stx_sc[...] = jnp.zeros_like(stx_sc)

        x = x_ref[...].astype(jnp.float32)
        t = t_ref[...].astype(jnp.float32)

        # Mask the (unspecified) padded rows / columns of remainder tiles.
        row = lax.broadcasted_iota(jnp.int32, (tn, tc), 0) + i * tn
        col = lax.broadcasted_iota(jnp.int32, (tn, tc), 1) + j * tc
        valid = (row < n) & (col < c)

        x_m = jnp.where(valid, x, _NEG_BIG)

        # Online logsumexp across class tiles.
        m_prev = m_sc[...]
        m_new = jnp.maximum(m_prev, jnp.max(x_m, axis=-1, keepdims=True))
        alpha = jnp.exp(m_prev - m_new)
        l_sc[...] = alpha * l_sc[...] + jnp.sum(
            jnp.exp(x_m - m_new), axis=-1, keepdims=True)
        m_sc[...] = m_new

        # Running sum(t) and sum(t * x) for the fused loss.
        st_sc[...] += jnp.sum(jnp.where(valid, t, 0.0), axis=-1, keepdims=True)
        stx_sc[...] += jnp.sum(jnp.where(valid, t * x, 0.0),
                               axis=-1, keepdims=True)

        @pl.when(j == n_class_blocks - 1)
        def _():
            lse = m_sc[...] + jnp.log(l_sc[...])        # (tn, 1)
            per_row = st_sc[...] * lse - stx_sc[...]    # (tn, 1)
            row0 = lax.broadcasted_iota(jnp.int32, (tn, 1), 0) + i * tn
            per_row = jnp.where(row0 < n, per_row, 0.0)
            block_sum = jnp.sum(per_row)
            out_ref[...] = jnp.full((1, 1, 128), block_sum, dtype=jnp.float32)

    return kernel


def _choose_tiles(n, c, itemsize):
    # Class tile: whole class dim when small, else 128-aligned chunks so the
    # per-tile VMEM footprint stays bounded on every generation (incl. v7x).
    tc = c if c <= 4096 else 4096

    # Batch tile: largest row count whose double-buffered footprint
    # (2 inputs x 2 pipeline buffers x tn x tc x itemsize) stays <= ~24 MiB.
    sub = 16 if itemsize < 4 else 8  # sublane packing multiple (bf16 vs f32)
    budget = 24 * 1024 * 1024
    max_tn = max(sub, (budget // (4 * tc * itemsize)) // sub * sub)
    tn = min(1024, max_tn)
    if n <= tn:
        tn = n  # whole batch in one block (full-dim block is always legal)
    return int(tn), int(tc)


def soft_target_cross_entropy(x, target, *, tile_rows=None, tile_cols=None):
    """mean over leading dims of sum(-target * log_softmax(x, axis=-1), -1)."""
    assert x.shape == target.shape, (x.shape, target.shape)
    c = x.shape[-1]
    n = math.prod(x.shape[:-1])  # == 1 for 1-D inputs

    # Keep native dtype (bf16 stays bf16 across the DMA); cast in-kernel.
    x2 = x.reshape(n, c)
    t2 = target.reshape(n, c)
    itemsize = jnp.dtype(x2.dtype).itemsize

    tn_auto, tc_auto = _choose_tiles(n, c, itemsize)
    tn = min(tile_rows, n) if tile_rows is not None else tn_auto
    tc = min(tile_cols, c) if tile_cols is not None else tc_auto

    nb = (n + tn - 1) // tn
    ncb = (c + tc - 1) // tc

    # Double-buffered input tiles + headroom, clamped so even v7x's 64 MiB
    # physical VMEM is comfortable.
    tile_bytes = 4 * tn * tc * itemsize
    vmem_limit = int(min(48 * 1024 * 1024,
                         max(16 * 1024 * 1024, tile_bytes + (8 << 20))))

    kernel = _make_kernel(n, c, tn, tc, ncb)

    partials = pl.pallas_call(
        kernel,
        out_shape=jax.ShapeDtypeStruct((nb, 1, 128), jnp.float32),
        grid=(nb, ncb),
        in_specs=[
            pl.BlockSpec((tn, tc), lambda i, j: (i, j)),
            pl.BlockSpec((tn, tc), lambda i, j: (i, j)),
        ],
        out_specs=pl.BlockSpec((1, 1, 128), lambda i, j: (i, 0, 0)),
        scratch_shapes=[pltpu.VMEM((tn, 1), jnp.float32) for _ in range(4)],
        compiler_params=pltpu.CompilerParams(
            dimension_semantics=("parallel", "arbitrary"),
            vmem_limit_bytes=vmem_limit,
        ),
    )(x2, t2)

    # Tiny final reduction and true-N mean in plain JAX (pairwise sum).
    return jnp.sum(partials[:, 0, 0]) / n


def soft_target_cross_entropy_ref(x, target):
    # Pure-JAX reference mirroring the PyTorch module.
    logp = jax.nn.log_softmax(x.astype(jnp.float32), axis=-1)
    loss = jnp.sum(-target.astype(jnp.float32) * logp, axis=-1)
    return jnp.mean(loss)


if __name__ == "__main__":
    key = jax.random.PRNGKey(0)
    k1, k2, k3, k4 = jax.random.split(key, 4)

    # Case 1: small single-tile path (batch=8, classes=32), f32.
    x1 = jax.random.normal(k1, (8, 32), dtype=jnp.float32)
    t1 = jax.nn.softmax(jax.random.normal(k2, (8, 32), dtype=jnp.float32), axis=-1)
    out1 = soft_target_cross_entropy(x1, t1)
    jax.block_until_ready(out1)
    ref1 = soft_target_cross_entropy_ref(x1, t1)
    assert jnp.allclose(out1, ref1, rtol=1e-5, atol=1e-5), (out1, ref1)

    # Case 2: exercises tiling + row/column remainder masking (70 x 200, f32).
    x2 = jax.random.normal(k3, (70, 200), dtype=jnp.float32)
    t2 = jax.nn.softmax(jax.random.normal(k4, (70, 200), dtype=jnp.float32), axis=-1)
    out2 = soft_target_cross_entropy(x2, t2, tile_rows=16, tile_cols=128)
    jax.block_until_ready(out2)
    ref2 = soft_target_cross_entropy_ref(x2, t2)
    assert jnp.allclose(out2, ref2, rtol=1e-5, atol=1e-5), (out2, ref2)

    # Case 3: bf16 inputs kept bf16 across the DMA; cast happens in-kernel.
    xb = x2.astype(jnp.bfloat16)
    tb = t2.astype(jnp.bfloat16)
    out3 = soft_target_cross_entropy(xb, tb, tile_rows=16, tile_cols=128)
    jax.block_until_ready(out3)
    ref3 = soft_target_cross_entropy_ref(xb, tb)
    assert jnp.allclose(out3, ref3, rtol=1e-3, atol=1e-3), (out3, ref3)

    print("KERNEL_OK")
</pallas_src>

<mosaic_0001>
module attributes {stable_mosaic.version = 11 : i64} {
  func.func @kernel(%arg0: i32, %arg1: i32, %arg2: memref<8x32xf32, #tpu.memory_space<vmem>>, %arg3: memref<8x32xf32, #tpu.memory_space<vmem>>, %arg4: memref<1x1x128xf32, #tpu.memory_space<vmem>>, %arg5: memref<8x1xf32, #tpu.memory_space<vmem>>, %arg6: memref<8x1xf32, #tpu.memory_space<vmem>>, %arg7: memref<8x1xf32, #tpu.memory_space<vmem>>, %arg8: memref<8x1xf32, #tpu.memory_space<vmem>>) attributes {dimension_semantics = [#tpu.dimension_semantics<parallel>, #tpu.dimension_semantics<arbitrary>], iteration_bounds = array<i64: 1, 1>, scalar_prefetch = 0 : i64, scratch_operands = 4 : i64, tpu.core_type = #tpu.core_type<tc>, window_params = [{transform_indices = @transform_0, window_bounds = array<i64: 8, 32>}, {transform_indices = @transform_1, window_bounds = array<i64: 8, 32>}, {transform_indices = @transform_2, window_bounds = array<i64: 1, 1, 128>}]} {
    %c0_i32 = arith.constant 0 : i32
    %0 = arith.cmpi eq, %arg1, %c0_i32 : i32
    %1 = arith.extui %0 : i1 to i32
    %c0_i32_0 = arith.constant 0 : i32
    %2 = arith.cmpi ne, %1, %c0_i32_0 : i32
    scf.if %2 {
      %cst_30 = arith.constant -1.000000e+30 : f32
      %54 = vector.broadcast %cst_30 : f32 to vector<8x1xf32>
      %c0_31 = arith.constant 0 : index
      %c0_32 = arith.constant 0 : index
      %55 = vector.load %arg5[%c0_31, %c0_32] : memref<8x1xf32, #tpu.memory_space<vmem>>, vector<8x1xf32>
      tpu.vector_store %arg5[%c0_31, %c0_32], %54 {strides = array<i32>} : memref<8x1xf32, #tpu.memory_space<vmem>>, vector<8x1xf32>,
      %cst_33 = arith.constant 0.000000e+00 : f32
      %56 = vector.broadcast %cst_33 : f32 to vector<8x1xf32>
      %c0_34 = arith.constant 0 : index
      %c0_35 = arith.constant 0 : index
      %57 = vector.load %arg6[%c0_34, %c0_35] : memref<8x1xf32, #tpu.memory_space<vmem>>, vector<8x1xf32>
      tpu.vector_store %arg6[%c0_34, %c0_35], %56 {strides = array<i32>} : memref<8x1xf32, #tpu.memory_space<vmem>>, vector<8x1xf32>,
      %cst_36 = arith.constant 0.000000e+00 : f32
      %58 = vector.broadcast %cst_36 : f32 to vector<8x1xf32>
      %c0_37 = arith.constant 0 : index
      %c0_38 = arith.constant 0 : index
      %59 = vector.load %arg7[%c0_37, %c0_38] : memref<8x1xf32, #tpu.memory_space<vmem>>, vector<8x1xf32>
      tpu.vector_store %arg7[%c0_37, %c0_38], %58 {strides = array<i32>} : memref<8x1xf32, #tpu.memory_space<vmem>>, vector<8x1xf32>,
      %cst_39 = arith.constant 0.000000e+00 : f32
      %60 = vector.broadcast %cst_39 : f32 to vector<8x1xf32>
      %c0_40 = arith.constant 0 : index
      %c0_41 = arith.constant 0 : index
      %61 = vector.load %arg8[%c0_40, %c0_41] : memref<8x1xf32, #tpu.memory_space<vmem>>, vector<8x1xf32>
      tpu.vector_store %arg8[%c0_40, %c0_41], %60 {strides = array<i32>} : memref<8x1xf32, #tpu.memory_space<vmem>>, vector<8x1xf32>,
    } else {
    }
    %c0 = arith.constant 0 : index
    %c0_1 = arith.constant 0 : index
    %3 = vector.load %arg2[%c0, %c0_1] : memref<8x32xf32, #tpu.memory_space<vmem>>, vector<8x32xf32>
    %c0_2 = arith.constant 0 : index
    %c0_3 = arith.constant 0 : index
    %4 = vector.load %arg3[%c0_2, %c0_3] : memref<8x32xf32, #tpu.memory_space<vmem>>, vector<8x32xf32>
    %5 = tpu.iota {dimensions = array<i32: 0>} : vector<8x32xi32>
    %c8_i32 = arith.constant 8 : i32
    %6 = arith.muli %arg0, %c8_i32 : i32
    %7 = vector.broadcast %6 : i32 to vector<8x32xi32>
    %8 = arith.addi %5, %7 : vector<8x32xi32>
    %9 = tpu.iota {dimensions = array<i32: 1>} : vector<8x32xi32>
    %c32_i32 = arith.constant 32 : i32
    %10 = arith.muli %arg1, %c32_i32 : i32
    %11 = vector.broadcast %10 : i32 to vector<8x32xi32>
    %12 = arith.addi %9, %11 : vector<8x32xi32>
    %c8_i32_4 = arith.constant 8 : i32
    %13 = vector.broadcast %c8_i32_4 : i32 to vector<8x32xi32>
    %14 = arith.cmpi slt, %8, %13 : vector<8x32xi32>
    %c32_i32_5 = arith.constant 32 : i32
    %15 = vector.broadcast %c32_i32_5 : i32 to vector<8x32xi32>
    %16 = arith.cmpi slt, %12, %15 : vector<8x32xi32>
    %17 = arith.andi %14, %16 : vector<8x32xi1>
    %cst = arith.constant -1.000000e+30 : f32
    %18 = vector.broadcast %cst : f32 to vector<8x32xf32>
    %19 = arith.select %17, %3, %18 : vector<8x32xi1>, vector<8x32xf32>
    %c0_6 = arith.constant 0 : index
    %c0_7 = arith.constant 0 : index
    %20 = vector.load %arg5[%c0_6, %c0_7] : memref<8x1xf32, #tpu.memory_space<vmem>>, vector<8x1xf32>
    %cst_8 = arith.constant dense<0xFF800000> : vector<8xf32>
    %21 = vector.multi_reduction <maximumf>, %19, %cst_8 [1] : vector<8x32xf32> to vector<8xf32>
    %22 = vector.shape_cast %21 : vector<8xf32> to vector<8x1xf32>
    %23 = arith.maximumf %20, %22 : vector<8x1xf32>
    %24 = arith.subf %20, %23 : vector<8x1xf32>
    %25 = math.exp %24 : vector<8x1xf32>
    %c0_9 = arith.constant 0 : index
    %c0_10 = arith.constant 0 : index
    %26 = vector.load %arg6[%c0_9, %c0_10] : memref<8x1xf32, #tpu.memory_space<vmem>>, vector<8x1xf32>
    %27 = arith.mulf %25, %26 : vector<8x1xf32>
    %28 = vector.broadcast %23 : vector<8x1xf32> to vector<8x32xf32>
    %29 = arith.subf %19, %28 : vector<8x32xf32>
    %30 = math.exp %29 : vector<8x32xf32>
    %cst_11 = arith.constant dense<0.000000e+00> : vector<8xf32>
    %31 = vector.multi_reduction <add>, %30, %cst_11 [1] : vector<8x32xf32> to vector<8xf32>
    %32 = vector.shape_cast %31 : vector<8xf32> to vector<8x1xf32>
    %33 = arith.addf %27, %32 : vector<8x1xf32>
    %c0_12 = arith.constant 0 : index
    %c0_13 = arith.constant 0 : index
    %34 = vector.load %arg6[%c0_12, %c0_13] : memref<8x1xf32, #tpu.memory_space<vmem>>, vector<8x1xf32>
    tpu.vector_store %arg6[%c0_12, %c0_13], %33 {strides = array<i32>} : memref<8x1xf32, #tpu.memory_space<vmem>>, vector<8x1xf32>,
    %c0_14 = arith.constant 0 : index
    %c0_15 = arith.constant 0 : index
    %35 = vector.load %arg5[%c0_14, %c0_15] : memref<8x1xf32, #tpu.memory_space<vmem>>, vector<8x1xf32>
    tpu.vector_store %arg5[%c0_14, %c0_15], %23 {strides = array<i32>} : memref<8x1xf32, #tpu.memory_space<vmem>>, vector<8x1xf32>,
    %c0_16 = arith.constant 0 : index
    %c0_17 = arith.constant 0 : index
    %36 = vector.load %arg7[%c0_16, %c0_17] : memref<8x1xf32, #tpu.memory_space<vmem>>, vector<8x1xf32>
    %cst_18 = arith.constant 0.000000e+00 : f32
    %37 = vector.broadcast %cst_18 : f32 to vector<8x32xf32>
    %38 = arith.select %17, %4, %37 : vector<8x32xi1>, vector<8x32xf32>
    %cst_19 = arith.constant dense<0.000000e+00> : vector<8xf32>
    %39 = vector.multi_reduction <add>, %38, %cst_19 [1] : vector<8x32xf32> to vector<8xf32>
    %40 = vector.shape_cast %39 : vector<8xf32> to vector<8x1xf32>
    %41 = arith.addf %36, %40 : vector<8x1xf32>
    %c0_20 = arith.constant 0 : index
    %c0_21 = arith.constant 0 : index
    %42 = vector.load %arg7[%c0_20, %c0_21] : memref<8x1xf32, #tpu.memory_space<vmem>>, vector<8x1xf32>
    tpu.vector_store %arg7[%c0_20, %c0_21], %41 {strides = array<i32>} : memref<8x1xf32, #tpu.memory_space<vmem>>, vector<8x1xf32>,
    %c0_22 = arith.constant 0 : index
    %c0_23 = arith.constant 0 : index
    %43 = vector.load %arg8[%c0_22, %c0_23] : memref<8x1xf32, #tpu.memory_space<vmem>>, vector<8x1xf32>
    %44 = arith.mulf %4, %3 : vector<8x32xf32>
    %cst_24 = arith.constant 0.000000e+00 : f32
    %45 = vector.broadcast %cst_24 : f32 to vector<8x32xf32>
    %46 = arith.select %17, %44, %45 : vector<8x32xi1>, vector<8x32xf32>
    %cst_25 = arith.constant dense<0.000000e+00> : vector<8xf32>
    %47 = vector.multi_reduction <add>, %46, %cst_25 [1] : vector<8x32xf32> to vector<8xf32>
    %48 = vector.shape_cast %47 : vector<8xf32> to vector<8x1xf32>
    %49 = arith.addf %43, %48 : vector<8x1xf32>
    %c0_26 = arith.constant 0 : index
    %c0_27 = arith.constant 0 : index
    %50 = vector.load %arg8[%c0_26, %c0_27] : memref<8x1xf32, #tpu.memory_space<vmem>>, vector<8x1xf32>
    tpu.vector_store %arg8[%c0_26, %c0_27], %49 {strides = array<i32>} : memref<8x1xf32, #tpu.memory_space<vmem>>, vector<8x1xf32>,
    %c0_i32_28 = arith.constant 0 : i32
    %51 = arith.cmpi eq, %arg1, %c0_i32_28 : i32
    %52 = arith.extui %51 : i1 to i32
    %c0_i32_29 = arith.constant 0 : i32
    %53 = arith.cmpi ne, %52, %c0_i32_29 : i32
    scf.if %53 {
      %c0_30 = arith.constant 0 : index
      %c0_31 = arith.constant 0 : index
      %54 = vector.load %arg5[%c0_30, %c0_31] : memref<8x1xf32, #tpu.memory_space<vmem>>, vector<8x1xf32>
      %c0_32 = arith.constant 0 : index
      %c0_33 = arith.constant 0 : index
      %55 = vector.load %arg6[%c0_32, %c0_33] : memref<8x1xf32, #tpu.memory_space<vmem>>, vector<8x1xf32>
      %56 = math.log %55 : vector<8x1xf32>
      %57 = arith.addf %54, %56 : vector<8x1xf32>
      %c0_34 = arith.constant 0 : index
      %c0_35 = arith.constant 0 : index
      %58 = vector.load %arg7[%c0_34, %c0_35] : memref<8x1xf32, #tpu.memory_space<vmem>>, vector<8x1xf32>
      %59 = arith.mulf %58, %57 : vector<8x1xf32>
      %c0_36 = arith.constant 0 : index
      %c0_37 = arith.constant 0 : index
      %60 = vector.load %arg8[%c0_36, %c0_37] : memref<8x1xf32, #tpu.memory_space<vmem>>, vector<8x1xf32>
      %61 = arith.subf %59, %60 : vector<8x1xf32>
      %62 = tpu.iota {dimensions = array<i32: 0>} : vector<8x1xi32>
      %c8_i32_38 = arith.constant 8 : i32
      %63 = arith.muli %arg0, %c8_i32_38 : i32
      %64 = vector.broadcast %63 : i32 to vector<8x1xi32>
      %65 = arith.addi %62, %64 : vector<8x1xi32>
      %c8_i32_39 = arith.constant 8 : i32
      %66 = vector.broadcast %c8_i32_39 : i32 to vector<8x1xi32>
      %67 = arith.cmpi slt, %65, %66 : vector<8x1xi32>
      %cst_40 = arith.constant 0.000000e+00 : f32
      %68 = vector.broadcast %cst_40 : f32 to vector<8x1xf32>
      %69 = arith.select %67, %61, %68 : vector<8x1xi1>, vector<8x1xf32>
      %70 = vector.shape_cast %69 : vector<8x1xf32> to vector<1x8x1xf32>
      %cst_41 = arith.constant dense<0.000000e+00> : vector<1xf32>
      %71 = vector.multi_reduction <add>, %70, %cst_41 [1, 2] : vector<1x8x1xf32> to vector<1xf32>
      %72 = vector.shape_cast %71 : vector<1xf32> to vector<1x1x1xf32>
      %73 = vector.extract %72[0, 0, 0] : f32 from vector<1x1x1xf32>
      %74 = vector.broadcast %73 : f32 to vector<1x1x128xf32>
      %c0_42 = arith.constant 0 : index
      %c0_43 = arith.constant 0 : index
      %c0_44 = arith.constant 0 : index
      %75 = vector.load %arg4[%c0_42, %c0_43, %c0_44] : memref<1x1x128xf32, #tpu.memory_space<vmem>>, vector<1x1x128xf32>
      tpu.vector_store %arg4[%c0_42, %c0_43, %c0_44], %74 {strides = array<i32>} : memref<1x1x128xf32, #tpu.memory_space<vmem>>, vector<1x1x128xf32>,
    } else {
    }
    return
  }
  func.func @transform_0(%arg0: i32, %arg1: i32) -> (i32, i32) {
    %c0_i32 = arith.constant 0 : i32
    return %arg0, %arg1 : i32, i32
  }
  func.func @transform_1(%arg0: i32, %arg1: i32) -> (i32, i32) {
    %c0_i32 = arith.constant 0 : i32
    return %arg0, %arg1 : i32, i32
  }
  func.func @transform_2(%arg0: i32, %arg1: i32) -> (i32, i32, i32) {
    %c0_i32 = arith.constant 0 : i32
    %c0_i32_0 = arith.constant 0 : i32
    %c0_i32_1 = arith.constant 0 : i32
    return %arg0, %c0_i32, %c0_i32_0 : i32, i32, i32
  }
}

</mosaic_0001>

<llo_original>
// kernel: tpu_custom_call.1
$region0: #{tpu_custom_call.1}
  #allocation0 [shape = 'u32[]', space=smem, size = 0x4, offset = 0x4, fixed_abs, tag = 'smem constant byte address 0x4 - core index']
  #allocation1 [shape = 'u32[144,128]{1,0:T(1,128)}', space=vmem, size = 0x12000, scoped, tag = 'internal scratch']
  #allocation2 [shape = 'f32[8,1]{1,0:T(8,128)}', space=vmem, size = 0x1000, scoped, tag = 'scratch operand']
  #allocation3 [shape = 'f32[8,1]{1,0:T(8,128)}', space=vmem, size = 0x1000, scoped, tag = 'scratch operand']
  #allocation4 [shape = 'f32[8,1]{1,0:T(8,128)}', space=vmem, size = 0x1000, scoped, tag = 'scratch operand']
  #allocation5 [shape = 'f32[8,1]{1,0:T(8,128)}', space=vmem, size = 0x1000, scoped, tag = 'scratch operand']
  %s0 = inlined_call_operand.hbm [shape: f32[8,32], index: 0, kind: input, shape index: {}]
  %s1 = inlined_call_operand.hbm [shape: f32[8,32], index: 1, kind: input, shape index: {}]
  %s2 = inlined_call_operand.hbm [shape: f32[1,1,128], index: 2, kind: output, shape index: {}]
  %s3 = sld [smem:[#allocation0]]
  $region34: #{tpu_custom_call.1} parent=0
    _
  %s5 = ssub.s32 1, %s3
  %s6 = scalar_select 0, %s5, %s3
  $region1: #{tpu_custom_call.1} parent=0
    #allocation6 [shape = 'u8[4096]{0}', space=vmem, size = 0x1000, scoped, tag = 'input window, operand 0, single buffered']
    #allocation7 [shape = 's32[1]{0}', space=sflag, size = 0x4, scoped, tag = 'scoped memory for tpu_custom_call.1']
    #allocation8 [shape = 's32[1]{0}', space=sflag, size = 0x4, scoped, tag = 'scoped memory for tpu_custom_call.1']
    #allocation9 [shape = 'u8[4096]{0}', space=vmem, size = 0x1000, scoped, tag = 'input window, operand 1, single buffered']
    #allocation10 [shape = 's32[1]{0}', space=sflag, size = 0x4, scoped, tag = 'scoped memory for tpu_custom_call.1']
    #allocation11 [shape = 'u8[512]{0}', space=vmem, size = 0x400, scoped, tag = 'output window, operand 0, single buffered']
    %7 = vsyncpa [#allocation7], 0
    %8 = vsyncpa [#allocation10], 0
    %9 = vsyncpa [#allocation8], 0
    // Predicated region
    $region2: #{tpu_custom_call.1} parent=1 // pred_check
      _
    $region3: #{tpu_custom_call.1} parent=1 // pred_check_branch
      %11 = sbr.rel (0) target = $region5
    $region4: #{tpu_custom_call.1} parent=1 // pred_region
      %s13 = ssub.s32 128, 128
      %14 = vsyncadd [#allocation7], %s13
      %s16 = sshll.u32 [#allocation6], 4
      %s17 = int_to_ptr.vmem [resolvable:$true] %s16
      %19 = dma.hbm_to_vmem [thread:$0]  %s0, 128, %s17, [#allocation7]
    $region5: #{tpu_custom_call.1} parent=1 // pred_fallthru
      _
    // Predicated region
    $region6: #{tpu_custom_call.1} parent=1 // pred_check
      _
    $region7: #{tpu_custom_call.1} parent=1 // pred_check_branch
      %21 = sbr.rel (0) target = $region9
    $region8: #{tpu_custom_call.1} parent=1 // pred_region
      %s23 = ssub.s32 128, 128
      %24 = vsyncadd [#allocation10], %s23
      %s26 = sshll.u32 [#allocation9], 4
      %s27 = int_to_ptr.vmem [resolvable:$true] %s26
      %29 = dma.hbm_to_vmem [thread:$0]  %s1, 128, %s27, [#allocation10]
    $region9: #{tpu_custom_call.1} parent=1 // pred_fallthru
      _
    // Predicated region
    $region10: #{tpu_custom_call.1} parent=1 // pred_check
      _
    $region11: #{tpu_custom_call.1} parent=1 // pred_check_branch
      %31 = sbr.rel (0) target = $region13
    $region12: #{tpu_custom_call.1} parent=1 // pred_region
      %32 = dma.done [#allocation7], 128
    $region13: #{tpu_custom_call.1} parent=1 // pred_fallthru
      _
    // Predicated region
    $region14: #{tpu_custom_call.1} parent=1 // pred_check
      _
    $region15: #{tpu_custom_call.1} parent=1 // pred_check_branch
      %34 = sbr.rel (0) target = $region17
    $region16: #{tpu_custom_call.1} parent=1 // pred_region
      %35 = dma.done [#allocation10], 128
    $region17: #{tpu_custom_call.1} parent=1 // pred_fallthru
      _
    %p36 = scmp.eq.s32.totalorder 0, 0
    // Predicated region
    $region18: #{tpu_custom_call.1} parent=1 // pred_check
      %p37 = pneg %p36
    $region19: #{tpu_custom_call.1} parent=1 // pred_check_branch
      %39 = sbr.rel (%p37) target = $region21
    $region20: #{tpu_custom_call.1} parent=1 // pred_region
      %vm40 = vcmask 7168
      %41 = vst.msk [vmem:[#allocation2] sm:$0xff] %vm40, -1e+30
      %42 = vst.msk [vmem:[#allocation3] sm:$0xff] %vm40, 0.0
      %43 = vst.msk [vmem:[#allocation4] sm:$0xff] %vm40, 0.0
      %44 = vst.msk [vmem:[#allocation5] sm:$0xff] %vm40, 0.0
    $region21: #{tpu_custom_call.1} parent=1 // pred_fallthru
      _
    %v45 = vld [vmem:[#allocation6] sm:$0xff]
    %v46 = vld [vmem:[#allocation9] sm:$0xff]
    %v47 = vlaneseq
    %v48 = vshrl.u32 %v47, 7
    %s49 = smul.u32 0, 8
    %v50 = vstv %s49
    %v51 = vadd.s32 %v48, %v50
    %v52 = vlaneseq
    %v53 = vand.u32 %v52, 127
    %s54 = smul.u32 0, 32
    %v55 = vstv %s54
    %v56 = vadd.s32 %v53, %v55
    %vm57 = vcmp.lt.s32.totalorder %v51, 8
    %vm58 = vcmp.lt.s32.totalorder %v56, 32
    %vm59 = vmand %vm57, %vm58
    %v60 = vsel %vm59, %v45, -1e+30
    %v61 = vld [vmem:[#allocation2] sm:$0xff]
    %vm62 = vcmask 261120
    %v63 = vsel %vm62, %v60, -inf
    %64 = vmax.xlane.f32.xlu0 %v63
    %v65 = vpop.xlane.xlu0 %64
    %v66 = vmax.f32 %v61, %v65
    %v67 = vsub.f32 %v61, %v66
    %v68 = vmul.f32 %v67, 1.442695
    %v69 = vpow.pop %v68
    %v70 = vld [vmem:[#allocation3] sm:$0xff]
    %v71 = vmul.f32 %v69, %v70
    %73 = vset.pattern.permute.xlu0 0
    %74 = vperm.xlu0 %73, %v66
    %v75 = vpop.permute.xlu0 %74
    %v77 = vsub.f32 %v60, %v75
    %v78 = vmul.f32 %v77, 1.442695
    %v79 = vpow.pop %v78
    %v80 = vsel %vm62, %v79, 0.0
    %81 = vadd.xlane.f32.xlu0 %v80
    %v82 = vpop.xlane.xlu0 %81
    %v83 = vadd.f32 %v71, %v82
    %vm84 = vcmask 7168
    %85 = vst.msk [vmem:[#allocation3] sm:$0xff] %vm84, %v83
    %86 = vst.msk [vmem:[#allocation2] sm:$0xff] %vm84, %v66
    %v87 = vld [vmem:[#allocation4] sm:$0xff]
    %v88 = vsel %vm59, %v46, 0.0
    %v89 = vsel %vm62, %v88, 0.0
    %90 = vadd.xlane.f32.xlu0 %v89
    %v91 = vpop.xlane.xlu0 %90
    %v92 = vadd.f32 %v87, %v91
    %93 = vst.msk [vmem:[#allocation4] sm:$0xff] %vm84, %v92
    %v94 = vld [vmem:[#allocation5] sm:$0xff]
    %v95 = vmul.f32 %v46, %v45
    %v96 = vsel %vm59, %v95, 0.0
    %v97 = vsel %vm62, %v96, 0.0
    %98 = vadd.xlane.f32.xlu0 %v97
    %v99 = vpop.xlane.xlu0 %98
    %v100 = vadd.f32 %v94, %v99
    %101 = vst.msk [vmem:[#allocation5] sm:$0xff] %vm84, %v100
    // Predicated region
    $region22: #{tpu_custom_call.1} parent=1 // pred_check
      %p102 = pneg %p36
    $region23: #{tpu_custom_call.1} parent=1 // pred_check_branch
      %104 = sbr.rel (%p102) target = $region25
    $region24: #{tpu_custom_call.1} parent=1 // pred_region
      %v105 = vld [vmem:[#allocation2] sm:$0xff]
      %v106 = vld [vmem:[#allocation3] sm:$0xff]
      %v107 = vlog2.pop %v106
      %v108 = vmul.f32 %v107, 0.6931472
      %v109 = vadd.f32 %v105, %v108
      %v110 = vld [vmem:[#allocation4] sm:$0xff]
      %v111 = vmul.f32 %v110, %v109
      %v112 = vld [vmem:[#allocation5] sm:$0xff]
      %v113 = vsub.f32 %v111, %v112
      %v114 = vsel %vm57, %v113, 0.0
      %v115 = vsel %vm84, %v114, 0.0
      %116 = vadd.xlane.f32.xlu0 %v115
      %v117 = vpop.xlane.xlu0 %116
      %v118 = vrot.slane %v117, 4
      %v119 = vadd.f32 %v117, %v118
      %v120 = vrot.slane %v119, 2
      %v121 = vadd.f32 %v119, %v120
      %v122 = vrot.slane %v121, 1
      %v123 = vadd.f32 %v121, %v122
      %s124 = vtos %v123
      %v125 = vstv %s124
      %126 = vst [vmem:[#allocation11] sm:$0x1] %v125
    $region25: #{tpu_custom_call.1} parent=1 // pred_fallthru
      _
    // Predicated region
    $region26: #{tpu_custom_call.1} parent=1 // pred_check
      _
    $region27: #{tpu_custom_call.1} parent=1 // pred_check_branch
      %128 = sbr.rel (0) target = $region29
    $region28: #{tpu_custom_call.1} parent=1 // pred_region
      %s130 = ssub.s32 16, 16
      %131 = vsyncadd [#allocation8], %s130
      %s133 = sshll.u32 [#allocation11], 4
      %s134 = int_to_ptr.vmem [resolvable:$true] %s133
      %136 = dma.vmem_to_hbm [thread:$0]  %s134, 16, %s2, [#allocation8]
    $region29: #{tpu_custom_call.1} parent=1 // pred_fallthru
      _
    // Predicated region
    $region30: #{tpu_custom_call.1} parent=1 // pred_check
      _
    $region31: #{tpu_custom_call.1} parent=1 // pred_check_branch
      %138 = sbr.rel (0) target = $region33
    $region32: #{tpu_custom_call.1} parent=1 // pred_region
      %139 = dma.done [#allocation8], 16
    $region33: #{tpu_custom_call.1} parent=1 // pred_fallthru
      _
    %140 = vsyncpa [#allocation7], 1
    %141 = vsyncpa [#allocation10], 1
    %142 = vsyncpa [#allocation8], 1

</llo_original>
